<compile_context>
chip_gen: v7x
topology: tpu7x:2x2x1
jax: 0.10.0
libtpu: 0.0.40
codegen_flags: <defaults>
</compile_context>

<pallas_src>
import jax
import jax.numpy as jnp
import numpy as np
from jax.experimental import pallas as pl
from jax.experimental.pallas import tpu as pltpu


# ~6 MiB per block => ~24 MiB for the double-buffered in+out pipeline: inside
# v7x's 32 MiB scoped / 64 MiB physical VMEM, far under v5e/v6e's 128 MiB, and
# large enough (>4 MiB) to amortize the ~0.35 us per-grid-step overhead.
_BLOCK_BUDGET_BYTES = 6 * 1024 * 1024


def _copy_kernel(x_ref, o_ref):
    # Zero-FLOP identity copy: the channel shuffle itself is expressed purely
    # through the BlockSpec index maps (input slab -> shuffled output slab).
    o_ref[...] = x_ref[...]


def _round_up(x, m):
    return ((x + m - 1) // m) * m


def _sublane_multiple(dtype):
    # Packed sublane multiple: 8 for 4-byte, 16 for 2-byte, 32 for 1-byte dtypes.
    return max(8, 32 // max(jnp.dtype(dtype).itemsize, 1))


def _largest_divisor_leq(n, cap):
    cap = int(max(1, min(n, cap)))
    for d in range(cap, 0, -1):
        if n % d == 0:
            return d
    return 1


def _pick_tiles(batch, cpg, row_bytes, sub, budget=_BLOCK_BUDGET_BYTES):
    """Pick (tb, tcp): batch-fold factor and channel tile.

    `row_bytes` is the VMEM-padded size of one channel row of the block.
    Never returns a tile above `budget` unless even a single sub-row tile
    already exceeds it (pathological spatial sizes)."""
    slab = cpg * row_bytes                        # one batch worth of block data
    if slab <= budget:
        tcp = cpg                                 # full extent -> always legal
        tb = _largest_divisor_leq(batch, budget // max(slab, 1))
        return tb, tcp
    max_rows = max(1, budget // max(row_bytes, 1))
    tcp = (max_rows // sub) * sub                 # round to packed sublane multiple
    tcp = min(max(tcp, min(sub, cpg)), cpg)
    return 1, tcp


def channel_shuffle(x, groups=2):
    """Pallas TPU forward of the PyTorch channel_shuffle module. x: (B, C, H, W)."""
    B, C, H, W = x.shape
    assert C % groups == 0, "C must be divisible by groups"
    cpg = C // groups
    HW = H * W
    itemsize = jnp.dtype(x.dtype).itemsize
    sub = _sublane_multiple(x.dtype)
    total_bytes = B * C * HW * itemsize

    # Pure memory-bound op: every byte read once + written once.
    cost = pl.CostEstimate(flops=0, transcendentals=0,
                           bytes_accessed=2 * total_bytes)

    if HW % 128 == 0:
        # ---- Path 1: lane-dense layout, H*W fused into the lane dimension ----
        # input view  (B, groups, cpg, HW): read slab [b, g, j*tcp:(j+1)*tcp, :]
        # output view (B, cpg, groups*HW):  write it at lane offset g*HW
        row_pad_bytes = HW * itemsize
        tb, tcp = _pick_tiles(B, cpg, row_pad_bytes, sub)
        n_cp = pl.cdiv(cpg, tcp)
        # v7x: keep >=2 grid steps when there is real data so both TCs get work.
        if (B // tb) * groups * n_cp == 1 and B >= 2 and total_bytes >= (2 << 20):
            tb = _largest_divisor_leq(B, max(1, tb // 2))
        grid = (B // tb, groups, n_cp)
        x_view = x.reshape(B, groups, cpg, HW)
        out_shape = jax.ShapeDtypeStruct((B, cpg, groups * HW), x.dtype)
        in_specs = [pl.BlockSpec((tb, None, tcp, HW),
                                 lambda b, g, j: (b, g, j, 0))]
        out_specs = pl.BlockSpec((tb, tcp, HW), lambda b, g, j: (b, j, g))
        block_vmem = tb * _round_up(tcp, sub) * HW * itemsize
    else:
        # ---- Path 2: general spatial sizes (H*W not a multiple of 128) ----
        # Keep the full-extent (H, W) as the minor block dims so the (8, 128)
        # divisibility rule never triggers; the kernel stays a pure identity
        # copy and no padding / fallback is needed.
        # input view  (B, groups, cpg, H, W); output view (B, cpg, groups, H, W)
        row_pad_bytes = _round_up(H, sub) * _round_up(W, 128) * itemsize
        tb, tcp = _pick_tiles(B, cpg, row_pad_bytes, sub)
        n_cp = pl.cdiv(cpg, tcp)
        if (B // tb) * groups * n_cp == 1 and B >= 2 and total_bytes >= (2 << 20):
            tb = _largest_divisor_leq(B, max(1, tb // 2))
        grid = (B // tb, groups, n_cp)
        x_view = x.reshape(B, groups, cpg, H, W)
        out_shape = jax.ShapeDtypeStruct((B, cpg, groups, H, W), x.dtype)
        in_specs = [pl.BlockSpec((tb, None, tcp, H, W),
                                 lambda b, g, j: (b, g, j, 0, 0))]
        out_specs = pl.BlockSpec((tb, tcp, None, H, W),
                                 lambda b, g, j: (b, j, g, 0, 0))
        block_vmem = tb * tcp * _round_up(H, sub) * _round_up(W, 128) * itemsize
        # TODO(synk): for very small output runs (HW*itemsize < ~512 B) fold all
        # groups into one block and shuffle in-VMEM to lengthen output DMA runs.

    # Explicit VMEM limit: 2 double-buffered input blocks + 2 output blocks plus
    # headroom, floored at 32 MiB and capped safely below v7x's 64 MiB physical
    # VMEM (so a tiling that fits v5e/v6e's 128 MiB cannot silently exceed v7x).
    vmem_limit = int(min(max(4 * block_vmem + (8 << 20), 32 << 20), 60 << 20))

    out = pl.pallas_call(
        _copy_kernel,
        out_shape=out_shape,
        grid=grid,
        in_specs=in_specs,
        out_specs=out_specs,
        cost_estimate=cost,
        compiler_params=pltpu.CompilerParams(
            dimension_semantics=("parallel",) * len(grid),
            vmem_limit_bytes=vmem_limit,
        ),
    )(x_view)

    return out.reshape(B, C, H, W)


# ----------------------------- pure-JAX reference -----------------------------
def _reference(x, groups=2):
    B, C, H, W = x.shape
    cpg = C // groups
    y = x.reshape(B, groups, cpg, H, W)
    y = jnp.transpose(y, (0, 2, 1, 3, 4))
    return y.reshape(B, C, H, W)


if __name__ == "__main__":
    key = jax.random.PRNGKey(0)
    k1, k2, k3 = jax.random.split(key, 3)

    # 1) Small shape implied by the module; lane-dense path (HW=256, %128==0).
    x1 = jax.random.normal(k1, (2, 4, 16, 16), jnp.float32)
    out1 = jax.block_until_ready(channel_shuffle(x1, groups=2))
    ref1 = _reference(x1, groups=2)
    assert out1.shape == x1.shape and out1.dtype == x1.dtype
    np.testing.assert_array_equal(np.asarray(out1), np.asarray(ref1))

    # 2) Real ShuffleNet-style spatial size (28x28, HW % 128 != 0): general path.
    x2 = jax.random.normal(k2, (2, 8, 28, 28), jnp.float32)
    out2 = jax.block_until_ready(channel_shuffle(x2, groups=4))
    np.testing.assert_array_equal(np.asarray(out2),
                                  np.asarray(_reference(x2, groups=4)))

    # 3) bf16 input (sublane packing 16), lane-dense path, different group count.
    x3 = jax.random.normal(k3, (2, 8, 16, 16), jnp.float32).astype(jnp.bfloat16)
    out3 = jax.block_until_ready(channel_shuffle(x3, groups=2))
    ref3 = _reference(x3, groups=2)
    np.testing.assert_array_equal(np.asarray(out3, dtype=np.float32),
                                  np.asarray(ref3, dtype=np.float32))

    print("KERNEL_OK")
</pallas_src>

<mosaic_0001>
module attributes {stable_mosaic.version = 11 : i64} {
  func.func @_copy_kernel(%arg0: i32, %arg1: i32, %arg2: i32, %arg3: memref<2x1x2x256xf32, #tpu.memory_space<vmem>>, %arg4: memref<2x2x256xf32, #tpu.memory_space<vmem>>) attributes {dimension_semantics = [#tpu.dimension_semantics<parallel>, #tpu.dimension_semantics<parallel>, #tpu.dimension_semantics<parallel>], iteration_bounds = array<i64: 1, 2, 1>, scalar_prefetch = 0 : i64, scratch_operands = 0 : i64, tpu.core_type = #tpu.core_type<tc>, window_params = [{transform_indices = @transform_0, window_bounds = array<i64: 2, 1, 2, 256>}, {transform_indices = @transform_1, window_bounds = array<i64: 2, 2, 256>}]} {
    %c0 = arith.constant 0 : index
    %c0_0 = arith.constant 0 : index
    %c0_1 = arith.constant 0 : index
    %c0_2 = arith.constant 0 : index
    %0 = vector.load %arg3[%c0, %c0_0, %c0_1, %c0_2] : memref<2x1x2x256xf32, #tpu.memory_space<vmem>>, vector<2x1x2x256xf32>
    %1 = vector.shape_cast %0 : vector<2x1x2x256xf32> to vector<2x2x256xf32>
    %c0_3 = arith.constant 0 : index
    %c0_4 = arith.constant 0 : index
    %c0_5 = arith.constant 0 : index
    %2 = vector.load %arg4[%c0_3, %c0_4, %c0_5] : memref<2x2x256xf32, #tpu.memory_space<vmem>>, vector<2x2x256xf32>
    tpu.vector_store %arg4[%c0_3, %c0_4, %c0_5], %1 {strides = array<i32>} : memref<2x2x256xf32, #tpu.memory_space<vmem>>, vector<2x2x256xf32>,
    return
  }
  func.func @transform_0(%arg0: i32, %arg1: i32, %arg2: i32) -> (i32, i32, i32, i32) {
    %c0_i32 = arith.constant 0 : i32
    %c0_i32_0 = arith.constant 0 : i32
    return %arg0, %arg1, %arg2, %c0_i32 : i32, i32, i32, i32
  }
  func.func @transform_1(%arg0: i32, %arg1: i32, %arg2: i32) -> (i32, i32, i32) {
    %c0_i32 = arith.constant 0 : i32
    return %arg0, %arg2, %arg1 : i32, i32, i32
  }
}

</mosaic_0001>

<llo_original>
// kernel: tpu_custom_call.1
$region0: #{tpu_custom_call.1}
  #allocation0 [shape = 'u32[]', space=smem, size = 0x4, offset = 0x4, fixed_abs, tag = 'smem constant byte address 0x4 - core index']
  #allocation1 [shape = 'u32[144,128]{1,0:T(1,128)}', space=vmem, size = 0x12000, scoped, tag = 'internal scratch']
  %s0 = inlined_call_operand.hbm [shape: f32[2,2,2,256], index: 0, kind: input, shape index: {}]
  %s1 = inlined_call_operand.hbm [shape: f32[2,2,512], index: 1, kind: output, shape index: {}]
  %s2 = sld [smem:[#allocation0]]
  $region41: #{tpu_custom_call.1} parent=0
    _
  %s4 = ssub.s32 1, %s2
  %s5 = scalar_select 0, %s4, %s2
  $region1: #{tpu_custom_call.1} parent=0
    #allocation2 [shape = 'u8[8192]{0}', space=vmem, size = 0x2000, scoped, tag = 'input window, operand 0']
    #allocation3 [shape = 's32[2]{0}', space=sflag, size = 0x8, scoped, tag = 'scoped memory for tpu_custom_call.1']
    #allocation4 [shape = 's32[2]{0}', space=sflag, size = 0x8, scoped, tag = 'scoped memory for tpu_custom_call.1']
    #allocation5 [shape = 'u8[8192]{0}', space=vmem, size = 0x2000, scoped, tag = 'output window, operand 0']
    %6 = vsyncpa [#allocation3], 0
    %s7 = scalar_lea.sflag [#allocation3], 1
    %8 = vsyncpa %s7, 0
    %9 = vsyncpa [#allocation4], 0
    %s10 = scalar_lea.sflag [#allocation4], 1
    %11 = vsyncpa %s10, 0
    loop: start=0, step=1, limit=4
    $region2: #{tpu_custom_call.1} parent=1 // loop_pre_header
      _
    $region3: #{tpu_custom_call.1} parent=1 // loop_header
      %s13 = sphi 0, %s17
      %p14 = scmp.ge.s32.totalorder %s13, 4
      %s20 = sphi 0, %s39
      %s21 = sphi 0, %s35
      %s22 = sphi 0, %s31
      %s23 = sphi 0, %s20
      %s24 = sphi 0, %s21
      %s25 = sphi 0, %s22
      %s26 = sphi 0, %s23
      %s27 = sphi 0, %s24
      %s28 = sphi 0, %s25
      %s46 = sphi 0, %s48
      %s49 = sphi 0, %s46
      %s50 = sphi 0, %s49
      %s66 = sphi 0, %s50
      %s76 = sphi 0, %s78
      %s79 = sphi 0, %s76
      %s80 = sphi 0, %s79
      %s96 = sphi 0, %s80
    $region4: #{tpu_custom_call.1} parent=1 // loop_header_branch
      %16 = sbr.rel (%p14) target = $region8
    $region5: #{tpu_custom_call.1} parent=1 // loop_body
      %s18 = ssub.s32 %s13, 1
      %s19 = ssub.s32 %s13, 2
      %s29 = sadd.s32 1, %s22
      %p30 = scmp.ge.s32.totalorder %s29, 1
      %s31 = scalar_select %p30, 0, %s29
      %s32 = sadd.s32 1, %s21
      %s33 = scalar_select %p30, %s32, %s21
      %p34 = scmp.ge.s32.totalorder %s33, 2
      %s35 = scalar_select %p34, 0, %s33
      %s36 = sadd.s32 1, %s20
      %s37 = scalar_select %p34, %s36, %s20
      %p38 = scmp.ge.s32.totalorder %s37, 1
      %s39 = scalar_select %p38, 0, %s37
      %s40 = ssub.s32 %s20, %s39
      %s41 = ssub.s32 %s21, %s35
      %s42 = sor.u32 %s40, %s41
      %s43 = ssub.s32 %s22, %s31
      %s44 = sor.u32 %s42, %s43
      %p45 = scmp.eq.s32.totalorder %s44, 0
      %s47 = sadd.s32 %s46, 1
      %s48 = scalar_select %p45, %s46, %s47
      %p51 = pneg %p45
      %p52 = scmp.eq.s32.totalorder %s13, 1
      %p53 = por %p51, %p52
      %p54 = scmp.ne.s32.totalorder %s46, %s49
      %p55 = scmp.eq.s32.totalorder %s13, 0
      %p56 = por %p54, %p55
      %p57 = scmp.ne.s32.totalorder %s46, %s49
      %p58 = scmp.eq.s32.totalorder %s18, 1
      %p59 = por %p57, %p58
      %p60 = scmp.ne.s32.totalorder %s49, %s50
      %p61 = scmp.eq.s32.totalorder %s18, 0
      %p62 = por %p60, %p61
      %p63 = scmp.ne.s32.totalorder %s49, %s50
      %p64 = scmp.eq.s32.totalorder %s19, 1
      %p65 = por %p63, %p64
      %p67 = scmp.ne.s32.totalorder %s50, %s66
      %p68 = scmp.eq.s32.totalorder %s19, 0
      %p69 = por %p67, %p68
      %s70 = ssub.s32 %s20, %s39
      %s71 = ssub.s32 %s22, %s31
      %s72 = sor.u32 %s70, %s71
      %s73 = ssub.s32 %s21, %s35
      %s74 = sor.u32 %s72, %s73
      %p75 = scmp.eq.s32.totalorder %s74, 0
      %s77 = sadd.s32 %s76, 1
      %s78 = scalar_select %p75, %s76, %s77
      %p81 = pneg %p75
      %p82 = scmp.eq.s32.totalorder %s13, 1
      %p83 = por %p81, %p82
      %p84 = scmp.ne.s32.totalorder %s76, %s79
      %p85 = scmp.eq.s32.totalorder %s13, 0
      %p86 = por %p84, %p85
      %p87 = scmp.ne.s32.totalorder %s76, %s79
      %p88 = scmp.eq.s32.totalorder %s18, 1
      %p89 = por %p87, %p88
      %p90 = scmp.ne.s32.totalorder %s79, %s80
      %p91 = scmp.eq.s32.totalorder %s18, 0
      %p92 = por %p90, %p91
      %p93 = scmp.ne.s32.totalorder %s79, %s80
      %p94 = scmp.eq.s32.totalorder %s19, 1
      %p95 = por %p93, %p94
      %p97 = scmp.ne.s32.totalorder %s80, %s96
      %p98 = scmp.eq.s32.totalorder %s19, 0
      %p99 = por %p97, %p98
      %p100 = scmp.le.s32.totalorder 1, %s13
      %p101 = scmp.lt.s32.totalorder %s13, 3
      %p102 = pnand %p100, %p101
      %p103 = pneg %p102
      // Predicated region
      $region9: #{tpu_custom_call.1} parent=5 // pred_check
        _
      $region10: #{tpu_custom_call.1} parent=5 // pred_check_branch
        %105 = sbr.rel (%p102) target = $region12
      $region11: #{tpu_custom_call.1} parent=5 // pred_region
        %s106 = ssub.s32 %s13, 1
      $region12: #{tpu_custom_call.1} parent=5 // pred_fallthru
        _
      %p107 = scmp.lt.s32.totalorder %s13, 2
      // Predicated region
      $region13: #{tpu_custom_call.1} parent=5 // pred_check
        %p108 = pneg %p107
      $region14: #{tpu_custom_call.1} parent=5 // pred_check_branch
        %110 = sbr.rel (%p108) target = $region16
      $region15: #{tpu_custom_call.1} parent=5 // pred_region
        // Predicated region
        $region17: #{tpu_custom_call.1} parent=15 // pred_check
          %p111 = pneg %p56
        $region18: #{tpu_custom_call.1} parent=15 // pred_check_branch
          %113 = sbr.rel (%p111) target = $region20
        $region19: #{tpu_custom_call.1} parent=15 // pred_region
          %s114 = sand.u32 %s46, 1
          %s115 = scalar_lea.sflag [#allocation3], %s114
          %s116 = sand.u32 %s46, 1
          %s117 = smul.addr %s116, 8
          %s118 = scalar_lea.vmem [#allocation2], %s117
          %s119 = smul.u32 2, %s20
          %s121 = ssub.s32 128, 128
          %122 = vsyncadd %s115, %s121
          %s123 = smul.addr %s22, 2
          %s124 = smul.addr %s21, 2
          %s125 = sadd.s32 %s123, %s124
          %s126 = smul.addr %s119, 4
          %s127 = sadd.s32 %s125, %s126
          %s128 = smul.addr %s127, 32
          %s129 = scalar_lea.hbm %s0, %s128
          %s130 = sshll.u32 %s118, 4
          %s131 = int_to_ptr.vmem [resolvable:$true] %s130
          %136 = dma.hbm_to_vmem [thread:$0]  %s129, 128, %s131, %s115, 128, 64, 4
        $region20: #{tpu_custom_call.1} parent=15 // pred_fallthru
          _
      $region16: #{tpu_custom_call.1} parent=5 // pred_fallthru
        _
      %p137 = scmp.le.s32.totalorder 1, %s13
      %p138 = scmp.lt.s32.totalorder %s13, 3
      %p139 = pnand %p137, %p138
      %p140 = pneg %p139
      // Predicated region
      $region21: #{tpu_custom_call.1} parent=5 // pred_check
        _
      $region22: #{tpu_custom_call.1} parent=5 // pred_check_branch
        %142 = sbr.rel (%p139) target = $region24
      $region23: #{tpu_custom_call.1} parent=5 // pred_region
        %s143 = ssub.s32 %s13, 1
        %s144 = sand.u32 %s49, 1
        %s145 = scalar_lea.sflag [#allocation3], %s144
        %s146 = sand.u32 %s49, 1
        %s147 = smul.addr %s146, 8
        %s148 = scalar_lea.vmem [#allocation2], %s147
        // Predicated region
        $region25: #{tpu_custom_call.1} parent=23 // pred_check
          %p149 = pneg %p62
        $region26: #{tpu_custom_call.1} parent=23 // pred_check_branch
          %151 = sbr.rel (%p149) target = $region28
        $region27: #{tpu_custom_call.1} parent=23 // pred_region
          %152 = dma.done %s145, 128
        $region28: #{tpu_custom_call.1} parent=23 // pred_fallthru
          _
        %s153 = sand.u32 %s49, 1
        %s154 = scalar_lea.sflag [#allocation3], %s153
        %s155 = sand.u32 %s49, 1
        %s156 = smul.addr %s155, 8
        %s157 = scalar_lea.vmem [#allocation2], %s156
        %p158 = pneg %p62
        %p159 = pneg %p59
        %p160 = pneg %p92
        %p161 = pneg %p89
        %s162 = sand.u32 %s79, 1
        %s163 = scalar_lea.sflag [#allocation4], %s162
        %s164 = sand.u32 %s79, 1
        %s165 = smul.addr %s164, 8
        %s166 = scalar_lea.vmem [#allocation5], %s165
        %s167 = smul.u32 2, %s23
        %s168 = smul.u32 2, %s23
        %s169 = smul.u32 2, %s24
        %v170 = vld [vmem:[%s148] sm:$0xf]
        %v171 = vld [vmem:[%s148 + $0x4] sm:$0xf]
        %172 = vst [vmem:[%s166] sm:$0xf] %v170
        %173 = vst [vmem:[%s166 + $0x4] sm:$0xf] %v171
        %s174 = sand.u32 %s79, 1
        %s175 = scalar_lea.sflag [#allocation4], %s174
        %s176 = sand.u32 %s79, 1
        %s177 = smul.addr %s176, 8
        %s178 = scalar_lea.vmem [#allocation5], %s177
        // Predicated region
        $region29: #{tpu_custom_call.1} parent=23 // pred_check
          %p179 = pneg %p89
        $region30: #{tpu_custom_call.1} parent=23 // pred_check_branch
          %181 = sbr.rel (%p179) target = $region32
        $region31: #{tpu_custom_call.1} parent=23 // pred_region
          %s182 = smul.u32 2, %s23
          %s183 = smul.u32 2, %s24
          %s185 = ssub.s32 128, 128
          %186 = vsyncadd %s175, %s185
          %s187 = smul.addr %s25, 4
          %s188 = sadd.s32 %s183, %s187
          %s189 = smul.addr %s182, 4
          %s190 = sadd.s32 %s188, %s189
          %s191 = smul.addr %s190, 32
          %s192 = scalar_lea.hbm %s1, %s191
          %s193 = sshll.u32 %s178, 4
          %s194 = int_to_ptr.vmem [resolvable:$true] %s193
          %199 = dma.vmem_to_hbm [thread:$0]  %s194, 128, %s192, %s175, 64, 128, 4
        $region32: #{tpu_custom_call.1} parent=23 // pred_fallthru
          _
      $region24: #{tpu_custom_call.1} parent=5 // pred_fallthru
        _
      %p200 = scmp.le.s32.totalorder 2, %s13
      // Predicated region
      $region33: #{tpu_custom_call.1} parent=5 // pred_check
        %p201 = pneg %p200
      $region34: #{tpu_custom_call.1} parent=5 // pred_check_branch
        %203 = sbr.rel (%p201) target = $region36
      $region35: #{tpu_custom_call.1} parent=5 // pred_region
        %s204 = ssub.s32 %s13, 2
        // Predicated region
        $region37: #{tpu_custom_call.1} parent=35 // pred_check
          %p205 = pneg %p95
        $region38: #{tpu_custom_call.1} parent=35 // pred_check_branch
          %207 = sbr.rel (%p205) target = $region40
        $region39: #{tpu_custom_call.1} parent=35 // pred_region
          %s208 = sand.u32 %s80, 1
          %s209 = scalar_lea.sflag [#allocation4], %s208
          %s210 = sand.u32 %s80, 1
          %s211 = smul.addr %s210, 8
          %s212 = scalar_lea.vmem [#allocation5], %s211
          %213 = dma.done %s209, 128
        $region40: #{tpu_custom_call.1} parent=35 // pred_fallthru
          _
      $region36: #{tpu_custom_call.1} parent=5 // pred_fallthru
        _
    $region6: #{tpu_custom_call.1} parent=1 // loop_footer
      %s17 = sadd.s32 1, %s13
    $region7: #{tpu_custom_call.1} parent=1 // loop_footer_branch
      %12 = sbr.rel target = $region3
    $region8: #{tpu_custom_call.1} parent=1 // loop_exit
      _
    %214 = vsyncpa [#allocation3], 1
    %s215 = scalar_lea.sflag [#allocation3], 1
    %216 = vsyncpa %s215, 1
    %217 = vsyncpa [#allocation4], 1
    %s218 = scalar_lea.sflag [#allocation4], 1
    %219 = vsyncpa %s218, 1

</llo_original>
